<compile_context>
chip_gen: v5e
topology: v5e:2x2
jax: 0.10.0
libtpu: 0.0.40
codegen_flags: <defaults>
</compile_context>

<pallas_src>
import functools
import math

import jax
import jax.numpy as jnp
from jax import lax
from jax.experimental import pallas as pl
from jax.experimental.pallas import tpu as pltpu

# ScalingFactor modules (no scale_file given) default to scale = 1.0
SCALE_SUM = 1.0      # name='output_sum'
SCALE_RBF_F = 1.0    # name='output_had'
INV_SQRT_2 = 1.0 / math.sqrt(2.0)


def _round_up(x, m):
    return ((x + m - 1) // m) * m


def _scaled_silu(x):
    # GemNet ScaledSiLU: silu(x) * (1 / 0.6)
    return jax.nn.silu(x) * (1.0 / 0.6)


def _mlp(x, w1, wres_ref, n_hidden, compute_dtype):
    # Dense(units_in -> units, act) + nHidden ResidualLayer(units, nLayers=2)
    # matmul inputs are cast to compute_dtype; accumulation stays f32.
    def mm(a, w):
        return jnp.dot(a.astype(compute_dtype), w.astype(compute_dtype),
                       preferred_element_type=jnp.float32)

    x = _scaled_silu(mm(x, w1))
    for i in range(n_hidden):
        y = _scaled_silu(mm(x, wres_ref[i, 0]))
        y = _scaled_silu(mm(y, wres_ref[i, 1]))
        x = (x + y) * INV_SQRT_2
    return x


# --------------------------- edge-tile kernel ---------------------------------
def _edge_kernel(idj_ref, m_ref, rbf_ref,
                 w_rbf_ref, w_rbf_f_ref, w_f1_ref, w_fres_ref, w_out_f_ref,
                 acc_ref, f_ref, *,
                 tiles_per_core, num_blocks, n_edges, atom_chunk, has_dup,
                 force_dtype):
    c = pl.program_id(0)                 # core ("parallel") axis
    k = pl.program_id(1)                 # edge-tile ("arbitrary") axis
    real_blk = c * tiles_per_core + k    # unclamped global edge-block id
    n_hidden = w_fres_ref.shape[0]
    tile_e = m_ref.shape[0]
    n_atoms_pad = acc_ref.shape[0]

    # init this core's partial accumulator on its first edge tile
    @pl.when(k == 0)
    def _():
        acc_ref[...] = jnp.zeros(acc_ref.shape, acc_ref.dtype)

    m = m_ref[...]        # (tile_e, emb_edge) f32
    rbf = rbf_ref[...]    # (tile_e, emb_rbf)  f32

    # ---- energy branch: elementwise product + atom-chunked scatter-sum ----
    def scatter_accumulate():
        rbf_e = jnp.dot(rbf, w_rbf_ref[...], preferred_element_type=jnp.float32)
        x = m * rbf_e
        if n_edges % tile_e != 0:
            # mask garbage rows of the partial tail block
            row = lax.broadcasted_iota(jnp.int32, (tile_e, 1), 0)
            x = jnp.where(real_blk * tile_e + row < n_edges, x, 0.0)
        ids = idj_ref[...]                              # (1, tile_e) int32
        # static (unrolled) loop over atom chunks keeps the one-hot small
        for a0 in range(0, n_atoms_pad, atom_chunk):
            a_iota = a0 + lax.broadcasted_iota(jnp.int32, (atom_chunk, tile_e), 0)
            onehot = (ids == a_iota).astype(jnp.float32)
            acc_ref[a0:a0 + atom_chunk, :] += jnp.dot(
                onehot, x, preferred_element_type=jnp.float32)

    if has_dup:
        # core 1 may revisit its last real block (clamped index); skip the add
        pl.when(real_blk < num_blocks)(scatter_accumulate)
    else:
        scatter_accumulate()

    # ---- force branch (direct_forces=True), fused in the same tile pass ----
    x_f = _mlp(m, w_f1_ref[...], w_fres_ref, n_hidden, force_dtype)
    rbf_f = jnp.dot(rbf, w_rbf_f_ref[...], preferred_element_type=jnp.float32)
    x_f = (x_f * rbf_f) * SCALE_RBF_F
    # transposed, lane-dense projection: (num_targets, tile_e)
    f_ref[...] = lax.dot_general(
        w_out_f_ref[...], x_f,
        dimension_numbers=(((0,), (1,)), ((), ())),
        preferred_element_type=jnp.float32)


# --------------------------- atom-tile kernel ----------------------------------
def _atom_kernel(acc_ref, w_e1_ref, w_eres_ref, w_out_e_ref, e_ref):
    n_hidden = w_eres_ref.shape[0]
    x = acc_ref[...] * SCALE_SUM
    x = _mlp(x, w_e1_ref[...], w_eres_ref, n_hidden, jnp.float32)
    e_ref[...] = jnp.dot(x, w_out_e_ref[...], preferred_element_type=jnp.float32)


# --------------------------- wrapper --------------------------------------------
def _tpu_config():
    # generation-aware VMEM budget and default edge tile
    try:
        cap = int(pltpu.get_tpu_info().vmem_capacity_bytes)
    except Exception:
        cap = 128 * 1024 * 1024
    vmem_limit = min(cap * 3 // 4, 100 * 1024 * 1024)   # ~48 MiB v7x, ~96 MiB v5e/v6e
    tile_e = 512 if cap <= 64 * 1024 * 1024 else 1024
    return vmem_limit, tile_e


def output_block(h, m, rbf, id_j, params, *, n_hidden, tile_e=None,
                 force_precision="f32"):
    n_atoms = h.shape[0]
    n_edges, emb_edge = m.shape
    emb_rbf = rbf.shape[1]
    num_targets = params["w_out_e"].shape[1]

    vmem_limit, tile_e_default = _tpu_config()
    if tile_e is None:
        tile_e = tile_e_default
    if n_edges <= tile_e:
        tile_e = n_edges                      # full-dim block (no (8,128) constraint)
    else:
        tile_e = max(128, (tile_e // 128) * 128)

    num_blocks = -(-n_edges // tile_e)
    num_cores = 2 if num_blocks >= 2 else 1   # megacore split on v7x, harmless else
    tiles_per_core = -(-num_blocks // num_cores)
    has_dup = num_cores * tiles_per_core > num_blocks

    n_atoms_pad8 = _round_up(n_atoms, 8)
    atom_chunk = min(256, n_atoms_pad8)
    n_atoms_pad = _round_up(n_atoms_pad8, atom_chunk)

    force_dtype = jnp.bfloat16 if force_precision == "bf16" else jnp.float32
    w_f1 = params["w_f1"].astype(force_dtype)
    w_fres = params["w_fres"].astype(force_dtype)

    idj2d = id_j.astype(jnp.int32).reshape(1, n_edges)   # metadata-only reshape

    def _blk(c, k):
        # clamp so no block is fully out of bounds (core 1 may revisit its last)
        return jnp.minimum(c * tiles_per_core + k, num_blocks - 1)

    def _resident(w, n_idx):
        nd = w.ndim
        if n_idx == 2:
            return pl.BlockSpec(w.shape, lambda c, k, _nd=nd: (0,) * _nd)
        return pl.BlockSpec(w.shape, lambda i, _nd=nd: (0,) * _nd)

    # ------------------ kernel 1: fused edge pass ------------------
    edge_inputs = (idj2d, m.astype(jnp.float32), rbf.astype(jnp.float32),
                   params["w_rbf"], params["w_rbf_f"], w_f1, w_fres,
                   params["w_out_f"])

    in_specs = [
        pl.BlockSpec((1, tile_e), lambda c, k: (0, _blk(c, k))),           # id_j
        pl.BlockSpec((tile_e, emb_edge), lambda c, k: (_blk(c, k), 0)),    # m
        pl.BlockSpec((tile_e, emb_rbf), lambda c, k: (_blk(c, k), 0)),     # rbf
    ] + [_resident(w, 2) for w in edge_inputs[3:]]                         # weights

    out_specs = (
        pl.BlockSpec((n_atoms_pad, emb_edge), lambda c, k: (c, 0)),        # partial acc
        pl.BlockSpec((num_targets, tile_e), lambda c, k: (0, _blk(c, k))), # forces^T
    )

    edge_kernel = functools.partial(
        _edge_kernel, tiles_per_core=tiles_per_core, num_blocks=num_blocks,
        n_edges=n_edges, atom_chunk=atom_chunk, has_dup=has_dup,
        force_dtype=force_dtype)

    acc_parts, f_t = pl.pallas_call(
        edge_kernel,
        out_shape=(
            jax.ShapeDtypeStruct((num_cores * n_atoms_pad, emb_edge), jnp.float32),
            jax.ShapeDtypeStruct((num_targets, n_edges), jnp.float32),
        ),
        grid_spec=pltpu.PrefetchScalarGridSpec(
            num_scalar_prefetch=0,
            grid=(num_cores, tiles_per_core),
            in_specs=in_specs,
            out_specs=out_specs,
        ),
        compiler_params=pltpu.CompilerParams(
            dimension_semantics=("parallel", "arbitrary"),
            vmem_limit_bytes=vmem_limit,
        ),
    )(*edge_inputs)

    # combine per-core partial scatter sums (tiny: num_cores x nAtoms x emb_edge)
    acc = acc_parts.reshape(num_cores, n_atoms_pad, emb_edge).sum(axis=0)

    # ------------------ kernel 2: atom MLP + out_energy ------------------
    tile_a = atom_chunk
    atom_inputs = (acc, params["w_e1"], params["w_eres"], params["w_out_e"])

    e_pad = pl.pallas_call(
        _atom_kernel,
        out_shape=jax.ShapeDtypeStruct((n_atoms_pad, num_targets), jnp.float32),
        grid_spec=pltpu.PrefetchScalarGridSpec(
            num_scalar_prefetch=0,
            grid=(n_atoms_pad // tile_a,),
            in_specs=[pl.BlockSpec((tile_a, emb_edge), lambda i: (i, 0))]
                     + [_resident(w, 1) for w in atom_inputs[1:]],
            out_specs=pl.BlockSpec((tile_a, num_targets), lambda i: (i, 0)),
        ),
        compiler_params=pltpu.CompilerParams(
            dimension_semantics=("parallel",),
            vmem_limit_bytes=vmem_limit,
        ),
    )(*atom_inputs)

    return e_pad[:n_atoms], jnp.transpose(f_t)


# ---------------- pure-JAX reference (mirrors the PyTorch forward) ----------------
def output_block_ref(h, m, rbf, id_j, params, *, n_hidden):
    n_atoms = h.shape[0]

    def mlp(x, w1, wres):
        x = _scaled_silu(x @ w1)
        for i in range(n_hidden):
            y = _scaled_silu(x @ wres[i, 0])
            y = _scaled_silu(y @ wres[i, 1])
            x = (x + y) * INV_SQRT_2
        return x

    rbf_emb_e = rbf @ params["w_rbf"]
    x = m * rbf_emb_e
    x_e = jnp.zeros((n_atoms, m.shape[1]), jnp.float32).at[id_j].add(x)
    x_e = x_e * SCALE_SUM
    x_e = mlp(x_e, params["w_e1"], params["w_eres"])
    e = x_e @ params["w_out_e"]

    x_f = mlp(m, params["w_f1"], params["w_fres"])
    rbf_emb_f = rbf @ params["w_rbf_f"]
    x_f = (x_f * rbf_emb_f) * SCALE_RBF_F
    f = x_f @ params["w_out_f"]
    return e, f


def make_params(key, emb_atom, emb_edge, emb_rbf, num_targets, n_hidden):
    ks = jax.random.split(key, 8)

    def init(k, shape):
        fan_in = shape[-2]
        return jax.random.normal(k, shape, jnp.float32) / jnp.sqrt(jnp.float32(fan_in))

    # TODO(synk): he_orthogonal_init / ScalingFactor fitting are init-time only;
    # scales are folded to 1.0 constants (no scale_file), weights use a simple init.
    return {
        # energy path
        "w_rbf":   init(ks[0], (emb_rbf, emb_edge)),                 # dense_rbf
        "w_e1":    init(ks[1], (emb_edge, emb_atom)),                # seq_energy dense1
        "w_eres":  init(ks[2], (n_hidden, 2, emb_atom, emb_atom)),   # residual layers
        "w_out_e": init(ks[3], (emb_atom, num_targets)),             # out_energy
        # force path (direct_forces=True)
        "w_rbf_f": init(ks[4], (emb_rbf, emb_edge)),                 # dense_rbf_F
        "w_f1":    init(ks[5], (emb_edge, emb_edge)),                # seq_forces dense1
        "w_fres":  init(ks[6], (n_hidden, 2, emb_edge, emb_edge)),   # residual layers
        "w_out_f": init(ks[7], (emb_edge, num_targets)),             # out_forces
    }


def _run_case(key, n_atoms, n_edges, emb_atom, emb_edge, emb_rbf,
              num_targets, n_hidden, tol, tile_e=None, force_precision="f32"):
    k_h, k_m, k_rbf, k_id, k_p = jax.random.split(key, 5)
    h = jax.random.normal(k_h, (n_atoms, emb_atom), jnp.float32)
    m = jax.random.normal(k_m, (n_edges, emb_edge), jnp.float32)
    rbf = jax.random.normal(k_rbf, (n_edges, emb_rbf), jnp.float32)
    id_j = jax.random.randint(k_id, (n_edges,), 0, n_atoms, jnp.int32)
    params = make_params(k_p, emb_atom, emb_edge, emb_rbf, num_targets, n_hidden)

    e_out, f_out = output_block(h, m, rbf, id_j, params, n_hidden=n_hidden,
                                tile_e=tile_e, force_precision=force_precision)
    jax.block_until_ready((e_out, f_out))

    e_ref, f_ref = output_block_ref(h, m, rbf, id_j, params, n_hidden=n_hidden)
    assert e_out.shape == (n_atoms, num_targets)
    assert f_out.shape == (n_edges, num_targets)
    assert jnp.allclose(e_out, e_ref, atol=tol, rtol=tol), "energy mismatch"
    assert jnp.allclose(f_out, f_ref, atol=tol, rtol=tol), "force mismatch"


if __name__ == "__main__":
    key = jax.random.PRNGKey(0)
    k1, k2, k3, k4 = jax.random.split(key, 4)

    # small shapes matching the module defaults: nAtoms=8, nEdges=32,
    # emb_size_atom=32, emb_size_edge=32, emb_size_rbf=16, num_targets=4, nHidden=2
    _run_case(k1, n_atoms=8, n_edges=32, emb_atom=32, emb_edge=32,
              emb_rbf=16, num_targets=4, n_hidden=2, tol=2e-3)

    # multi-tile path: 2-core split, partial tail block masking (1000 % 256 != 0)
    _run_case(k2, n_atoms=64, n_edges=1000, emb_atom=64, emb_edge=64,
              emb_rbf=16, num_targets=3, n_hidden=2, tol=5e-3, tile_e=256)

    # odd block count -> clamped duplicate block on core 1 (skip-accumulate path)
    _run_case(k3, n_atoms=64, n_edges=1000, emb_atom=64, emb_edge=64,
              emb_rbf=16, num_targets=3, n_hidden=2, tol=5e-3, tile_e=384)

    # bf16 force-MLP lever (f32 accumulation; scatter + energy path stay f32)
    _run_case(k4, n_atoms=64, n_edges=1000, emb_atom=64, emb_edge=64,
              emb_rbf=16, num_targets=3, n_hidden=2, tol=5e-2, tile_e=256,
              force_precision="bf16")

    print("KERNEL_OK")
</pallas_src>

<mosaic_0001>
module attributes {stable_mosaic.version = 11 : i64} {
  func.func @_edge_kernel(%arg0: i32, %arg1: i32, %arg2: memref<1x32xi32, #tpu.memory_space<vmem>>, %arg3: memref<32x32xf32, #tpu.memory_space<vmem>>, %arg4: memref<32x16xf32, #tpu.memory_space<vmem>>, %arg5: memref<16x32xf32, #tpu.memory_space<vmem>>, %arg6: memref<16x32xf32, #tpu.memory_space<vmem>>, %arg7: memref<32x32xf32, #tpu.memory_space<vmem>>, %arg8: memref<2x2x32x32xf32, #tpu.memory_space<vmem>>, %arg9: memref<32x4xf32, #tpu.memory_space<vmem>>, %arg10: memref<8x32xf32, #tpu.memory_space<vmem>>, %arg11: memref<4x32xf32, #tpu.memory_space<vmem>>) attributes {dimension_semantics = [#tpu.dimension_semantics<parallel>, #tpu.dimension_semantics<arbitrary>], iteration_bounds = array<i64: 1, 1>, scalar_prefetch = 0 : i64, scratch_operands = 0 : i64, tpu.core_type = #tpu.core_type<tc>, window_params = [{transform_indices = @transform_0, window_bounds = array<i64: 1, 32>}, {transform_indices = @transform_1, window_bounds = array<i64: 32, 32>}, {transform_indices = @transform_2, window_bounds = array<i64: 32, 16>}, {pipeline_mode = #tpu.pipeline_mode<synchronous>, transform_indices = @transform_3, window_bounds = array<i64: 16, 32>}, {pipeline_mode = #tpu.pipeline_mode<synchronous>, transform_indices = @transform_4, window_bounds = array<i64: 16, 32>}, {pipeline_mode = #tpu.pipeline_mode<synchronous>, transform_indices = @transform_5, window_bounds = array<i64: 32, 32>}, {pipeline_mode = #tpu.pipeline_mode<synchronous>, transform_indices = @transform_6, window_bounds = array<i64: 2, 2, 32, 32>}, {pipeline_mode = #tpu.pipeline_mode<synchronous>, transform_indices = @transform_7, window_bounds = array<i64: 32, 4>}, {transform_indices = @transform_8, window_bounds = array<i64: 8, 32>}, {transform_indices = @transform_9, window_bounds = array<i64: 4, 32>}]} {
    %c0_i32 = arith.constant 0 : i32
    %0 = arith.cmpi eq, %arg1, %c0_i32 : i32
    %1 = arith.extui %0 : i1 to i32
    %c0_i32_0 = arith.constant 0 : i32
    %2 = arith.cmpi ne, %1, %c0_i32_0 : i32
    scf.if %2 {
      %cst_57 = arith.constant 0.000000e+00 : f32
      %88 = vector.broadcast %cst_57 : f32 to vector<8x32xf32>
      %c0_58 = arith.constant 0 : index
      %c0_59 = arith.constant 0 : index
      %89 = vector.load %arg10[%c0_58, %c0_59] : memref<8x32xf32, #tpu.memory_space<vmem>>, vector<8x32xf32>
      tpu.vector_store %arg10[%c0_58, %c0_59], %88 {strides = array<i32>} : memref<8x32xf32, #tpu.memory_space<vmem>>, vector<8x32xf32>,
    } else {
    }
    %c0 = arith.constant 0 : index
    %c0_1 = arith.constant 0 : index
    %3 = vector.load %arg3[%c0, %c0_1] : memref<32x32xf32, #tpu.memory_space<vmem>>, vector<32x32xf32>
    %c0_2 = arith.constant 0 : index
    %c0_3 = arith.constant 0 : index
    %4 = vector.load %arg4[%c0_2, %c0_3] : memref<32x16xf32, #tpu.memory_space<vmem>>, vector<32x16xf32>
    %c0_4 = arith.constant 0 : index
    %c0_5 = arith.constant 0 : index
    %5 = vector.load %arg5[%c0_4, %c0_5] : memref<16x32xf32, #tpu.memory_space<vmem>>, vector<16x32xf32>
    %cst = arith.constant dense<0.000000e+00> : vector<32x32xf32>
    %6 = tpu.matmul %4, %5, %cst {dimension_numbers = #tpu.dot_dimension_numbers<[1], [0], [0], [1], [0, 0, 1, 1], [], []>} : vector<32x16xf32>, vector<16x32xf32>, vector<32x32xf32> -> vector<32x32xf32>
    %7 = arith.mulf %3, %6 : vector<32x32xf32>
    %c0_6 = arith.constant 0 : index
    %c0_7 = arith.constant 0 : index
    %8 = vector.load %arg2[%c0_6, %c0_7] : memref<1x32xi32, #tpu.memory_space<vmem>>, vector<1x32xi32>
    %9 = tpu.iota {dimensions = array<i32: 0>} : vector<8x32xi32>
    %c0_i32_8 = arith.constant 0 : i32
    %10 = vector.broadcast %c0_i32_8 : i32 to vector<8x32xi32>
    %11 = arith.addi %10, %9 : vector<8x32xi32>
    %12 = vector.broadcast %8 : vector<1x32xi32> to vector<8x32xi32>
    %13 = arith.cmpi eq, %12, %11 : vector<8x32xi32>
    %14 = arith.extui %13 : vector<8x32xi1> to vector<8x32xi32>
    %15 = arith.sitofp %14 : vector<8x32xi32> to vector<8x32xf32>
    %c0_9 = arith.constant 0 : index
    %c0_10 = arith.constant 0 : index
    %16 = vector.load %arg10[%c0_9, %c0_10] : memref<8x32xf32, #tpu.memory_space<vmem>>, vector<8x32xf32>
    %cst_11 = arith.constant dense<0.000000e+00> : vector<8x32xf32>
    %17 = tpu.matmul %15, %7, %cst_11 {dimension_numbers = #tpu.dot_dimension_numbers<[1], [0], [0], [1], [0, 0, 1, 1], [], []>} : vector<8x32xf32>, vector<32x32xf32>, vector<8x32xf32> -> vector<8x32xf32>
    %18 = arith.addf %16, %17 : vector<8x32xf32>
    %c0_12 = arith.constant 0 : index
    %c0_13 = arith.constant 0 : index
    %19 = vector.load %arg10[%c0_12, %c0_13] : memref<8x32xf32, #tpu.memory_space<vmem>>, vector<8x32xf32>
    tpu.vector_store %arg10[%c0_12, %c0_13], %18 {strides = array<i32>} : memref<8x32xf32, #tpu.memory_space<vmem>>, vector<8x32xf32>,
    %c0_14 = arith.constant 0 : index
    %c0_15 = arith.constant 0 : index
    %20 = vector.load %arg7[%c0_14, %c0_15] : memref<32x32xf32, #tpu.memory_space<vmem>>, vector<32x32xf32>
    %cst_16 = arith.constant dense<0.000000e+00> : vector<32x32xf32>
    %21 = tpu.matmul %3, %20, %cst_16 {dimension_numbers = #tpu.dot_dimension_numbers<[1], [0], [0], [1], [0, 0, 1, 1], [], []>} : vector<32x32xf32>, vector<32x32xf32>, vector<32x32xf32> -> vector<32x32xf32>
    %22 = arith.negf %21 : vector<32x32xf32>
    %23 = math.exp %22 : vector<32x32xf32>
    %cst_17 = arith.constant 1.000000e+00 : f32
    %24 = vector.broadcast %cst_17 : f32 to vector<32x32xf32>
    %25 = arith.addf %24, %23 : vector<32x32xf32>
    %26 = arith.divf %24, %25 : vector<32x32xf32>
    %27 = arith.mulf %21, %26 : vector<32x32xf32>
    %cst_18 = arith.constant 1.66666663 : f32
    %28 = vector.broadcast %cst_18 : f32 to vector<32x32xf32>
    %29 = arith.mulf %27, %28 : vector<32x32xf32>
    %c0_19 = arith.constant 0 : index
    %c0_20 = arith.constant 0 : index
    %c0_21 = arith.constant 0 : index
    %c0_22 = arith.constant 0 : index
    %30 = vector.load %arg8[%c0_19, %c0_20, %c0_21, %c0_22] : memref<2x2x32x32xf32, #tpu.memory_space<vmem>>, vector<1x1x32x32xf32>
    %31 = vector.shape_cast %30 : vector<1x1x32x32xf32> to vector<32x32xf32>
    %cst_23 = arith.constant dense<0.000000e+00> : vector<32x32xf32>
    %32 = tpu.matmul %29, %31, %cst_23 {dimension_numbers = #tpu.dot_dimension_numbers<[1], [0], [0], [1], [0, 0, 1, 1], [], []>} : vector<32x32xf32>, vector<32x32xf32>, vector<32x32xf32> -> vector<32x32xf32>
    %33 = arith.negf %32 : vector<32x32xf32>
    %34 = math.exp %33 : vector<32x32xf32>
    %cst_24 = arith.constant 1.000000e+00 : f32
    %35 = vector.broadcast %cst_24 : f32 to vector<32x32xf32>
    %36 = arith.addf %35, %34 : vector<32x32xf32>
    %37 = arith.divf %35, %36 : vector<32x32xf32>
    %38 = arith.mulf %32, %37 : vector<32x32xf32>
    %cst_25 = arith.constant 1.66666663 : f32
    %39 = vector.broadcast %cst_25 : f32 to vector<32x32xf32>
    %40 = arith.mulf %38, %39 : vector<32x32xf32>
    %c0_26 = arith.constant 0 : index
    %c1 = arith.constant 1 : index
    %c0_27 = arith.constant 0 : index
    %c0_28 = arith.constant 0 : index
    %41 = vector.load %arg8[%c0_26, %c1, %c0_27, %c0_28] : memref<2x2x32x32xf32, #tpu.memory_space<vmem>>, vector<1x1x32x32xf32>
    %42 = vector.shape_cast %41 : vector<1x1x32x32xf32> to vector<32x32xf32>
    %cst_29 = arith.constant dense<0.000000e+00> : vector<32x32xf32>
    %43 = tpu.matmul %40, %42, %cst_29 {dimension_numbers = #tpu.dot_dimension_numbers<[1], [0], [0], [1], [0, 0, 1, 1], [], []>} : vector<32x32xf32>, vector<32x32xf32>, vector<32x32xf32> -> vector<32x32xf32>
    %44 = arith.negf %43 : vector<32x32xf32>
    %45 = math.exp %44 : vector<32x32xf32>
    %cst_30 = arith.constant 1.000000e+00 : f32
    %46 = vector.broadcast %cst_30 : f32 to vector<32x32xf32>
    %47 = arith.addf %46, %45 : vector<32x32xf32>
    %48 = arith.divf %46, %47 : vector<32x32xf32>
    %49 = arith.mulf %43, %48 : vector<32x32xf32>
    %cst_31 = arith.constant 1.66666663 : f32
    %50 = vector.broadcast %cst_31 : f32 to vector<32x32xf32>
    %51 = arith.mulf %49, %50 : vector<32x32xf32>
    %52 = arith.addf %29, %51 : vector<32x32xf32>
    %cst_32 = arith.constant 0.707106769 : f32
    %53 = vector.broadcast %cst_32 : f32 to vector<32x32xf32>
    %54 = arith.mulf %52, %53 : vector<32x32xf32>
    %c1_33 = arith.constant 1 : index
    %c0_34 = arith.constant 0 : index
    %c0_35 = arith.constant 0 : index
    %c0_36 = arith.constant 0 : index
    %55 = vector.load %arg8[%c1_33, %c0_34, %c0_35, %c0_36] : memref<2x2x32x32xf32, #tpu.memory_space<vmem>>, vector<1x1x32x32xf32>
    %56 = vector.shape_cast %55 : vector<1x1x32x32xf32> to vector<32x32xf32>
    %cst_37 = arith.constant dense<0.000000e+00> : vector<32x32xf32>
    %57 = tpu.matmul %54, %56, %cst_37 {dimension_numbers = #tpu.dot_dimension_numbers<[1], [0], [0], [1], [0, 0, 1, 1], [], []>} : vector<32x32xf32>, vector<32x32xf32>, vector<32x32xf32> -> vector<32x32xf32>
    %58 = arith.negf %57 : vector<32x32xf32>
    %59 = math.exp %58 : vector<32x32xf32>
    %cst_38 = arith.constant 1.000000e+00 : f32
    %60 = vector.broadcast %cst_38 : f32 to vector<32x32xf32>
    %61 = arith.addf %60, %59 : vector<32x32xf32>
    %62 = arith.divf %60, %61 : vector<32x32xf32>
    %63 = arith.mulf %57, %62 : vector<32x32xf32>
    %cst_39 = arith.constant 1.66666663 : f32
    %64 = vector.broadcast %cst_39 : f32 to vector<32x32xf32>
    %65 = arith.mulf %63, %64 : vector<32x32xf32>
    %c1_40 = arith.constant 1 : index
    %c1_41 = arith.constant 1 : index
    %c0_42 = arith.constant 0 : index
    %c0_43 = arith.constant 0 : index
    %66 = vector.load %arg8[%c1_40, %c1_41, %c0_42, %c0_43] : memref<2x2x32x32xf32, #tpu.memory_space<vmem>>, vector<1x1x32x32xf32>
    %67 = vector.shape_cast %66 : vector<1x1x32x32xf32> to vector<32x32xf32>
    %cst_44 = arith.constant dense<0.000000e+00> : vector<32x32xf32>
    %68 = tpu.matmul %65, %67, %cst_44 {dimension_numbers = #tpu.dot_dimension_numbers<[1], [0], [0], [1], [0, 0, 1, 1], [], []>} : vector<32x32xf32>, vector<32x32xf32>, vector<32x32xf32> -> vector<32x32xf32>
    %69 = arith.negf %68 : vector<32x32xf32>
    %70 = math.exp %69 : vector<32x32xf32>
    %cst_45 = arith.constant 1.000000e+00 : f32
    %71 = vector.broadcast %cst_45 : f32 to vector<32x32xf32>
    %72 = arith.addf %71, %70 : vector<32x32xf32>
    %73 = arith.divf %71, %72 : vector<32x32xf32>
    %74 = arith.mulf %68, %73 : vector<32x32xf32>
    %cst_46 = arith.constant 1.66666663 : f32
    %75 = vector.broadcast %cst_46 : f32 to vector<32x32xf32>
    %76 = arith.mulf %74, %75 : vector<32x32xf32>
    %77 = arith.addf %54, %76 : vector<32x32xf32>
    %cst_47 = arith.constant 0.707106769 : f32
    %78 = vector.broadcast %cst_47 : f32 to vector<32x32xf32>
    %79 = arith.mulf %77, %78 : vector<32x32xf32>
    %c0_48 = arith.constant 0 : index
    %c0_49 = arith.constant 0 : index
    %80 = vector.load %arg6[%c0_48, %c0_49] : memref<16x32xf32, #tpu.memory_space<vmem>>, vector<16x32xf32>
    %cst_50 = arith.constant dense<0.000000e+00> : vector<32x32xf32>
    %81 = tpu.matmul %4, %80, %cst_50 {dimension_numbers = #tpu.dot_dimension_numbers<[1], [0], [0], [1], [0, 0, 1, 1], [], []>} : vector<32x16xf32>, vector<16x32xf32>, vector<32x32xf32> -> vector<32x32xf32>
    %82 = arith.mulf %79, %81 : vector<32x32xf32>
    %cst_51 = arith.constant 1.000000e+00 : f32
    %83 = vector.broadcast %cst_51 : f32 to vector<32x32xf32>
    %84 = arith.mulf %82, %83 : vector<32x32xf32>
    %c0_52 = arith.constant 0 : index
    %c0_53 = arith.constant 0 : index
    %85 = vector.load %arg9[%c0_52, %c0_53] : memref<32x4xf32, #tpu.memory_space<vmem>>, vector<32x4xf32>
    %cst_54 = arith.constant dense<0.000000e+00> : vector<4x32xf32>
    %86 = tpu.matmul %85, %84, %cst_54 {dimension_numbers = #tpu.dot_dimension_numbers<[0], [1], [1], [0], [0, 1, 1, 0], [], []>} : vector<32x4xf32>, vector<32x32xf32>, vector<4x32xf32> -> vector<4x32xf32>
    %c0_55 = arith.constant 0 : index
    %c0_56 = arith.constant 0 : index
    %87 = vector.load %arg11[%c0_55, %c0_56] : memref<4x32xf32, #tpu.memory_space<vmem>>, vector<4x32xf32>
    tpu.vector_store %arg11[%c0_55, %c0_56], %86 {strides = array<i32>} : memref<4x32xf32, #tpu.memory_space<vmem>>, vector<4x32xf32>,
    return
  }
  func.func @transform_0(%arg0: i32, %arg1: i32) -> (i32, i32) {
    %c1_i32 = arith.constant 1 : i32
    %0 = arith.muli %arg0, %c1_i32 : i32
    %1 = arith.addi %0, %arg1 : i32
    %c0_i32 = arith.constant 0 : i32
    %2 = arith.minsi %1, %c0_i32 : i32
    %c0_i32_0 = arith.constant 0 : i32
    %c0_i32_1 = arith.constant 0 : i32
    return %c0_i32_0, %2 : i32, i32
  }
  func.func @transform_1(%arg0: i32, %arg1: i32) -> (i32, i32) {
    %c1_i32 = arith.constant 1 : i32
    %0 = arith.muli %arg0, %c1_i32 : i32
    %1 = arith.addi %0, %arg1 : i32
    %c0_i32 = arith.constant 0 : i32
    %2 = arith.minsi %1, %c0_i32 : i32
    %c0_i32_0 = arith.constant 0 : i32
    %c0_i32_1 = arith.constant 0 : i32
    return %2, %c0_i32_0 : i32, i32
  }
  func.func @transform_2(%arg0: i32, %arg1: i32) -> (i32, i32) {
    %c1_i32 = arith.constant 1 : i32
    %0 = arith.muli %arg0, %c1_i32 : i32
    %1 = arith.addi %0, %arg1 : i32
    %c0_i32 = arith.constant 0 : i32
    %2 = arith.minsi %1, %c0_i32 : i32
    %c0_i32_0 = arith.constant 0 : i32
    %c0_i32_1 = arith.constant 0 : i32
    return %2, %c0_i32_0 : i32, i32
  }
  func.func @transform_3(%arg0: i32, %arg1: i32) -> (i32, i32) {
    %c0_i32 = arith.constant 0 : i32
    %c0_i32_0 = arith.constant 0 : i32
    %c0_i32_1 = arith.constant 0 : i32
    return %c0_i32, %c0_i32_0 : i32, i32
  }
  func.func @transform_4(%arg0: i32, %arg1: i32) -> (i32, i32) {
    %c0_i32 = arith.constant 0 : i32
    %c0_i32_0 = arith.constant 0 : i32
    %c0_i32_1 = arith.constant 0 : i32
    return %c0_i32, %c0_i32_0 : i32, i32
  }
  func.func @transform_5(%arg0: i32, %arg1: i32) -> (i32, i32) {
    %c0_i32 = arith.constant 0 : i32
    %c0_i32_0 = arith.constant 0 : i32
    %c0_i32_1 = arith.constant 0 : i32
    return %c0_i32, %c0_i32_0 : i32, i32
  }
  func.func @transform_6(%arg0: i32, %arg1: i32) -> (i32, i32, i32, i32) {
    %c0_i32 = arith.constant 0 : i32
    %c0_i32_0 = arith.constant 0 : i32
    %c0_i32_1 = arith.constant 0 : i32
    %c0_i32_2 = arith.constant 0 : i32
    %c0_i32_3 = arith.constant 0 : i32
    return %c0_i32, %c0_i32_0, %c0_i32_1, %c0_i32_2 : i32, i32, i32, i32
  }
  func.func @transform_7(%arg0: i32, %arg1: i32) -> (i32, i32) {
    %c0_i32 = arith.constant 0 : i32
    %c0_i32_0 = arith.constant 0 : i32
    %c0_i32_1 = arith.constant 0 : i32
    return %c0_i32, %c0_i32_0 : i32, i32
  }
  func.func @transform_8(%arg0: i32, %arg1: i32) -> (i32, i32) {
    %c0_i32 = arith.constant 0 : i32
    %c0_i32_0 = arith.constant 0 : i32
    return %arg0, %c0_i32 : i32, i32
  }
  func.func @transform_9(%arg0: i32, %arg1: i32) -> (i32, i32) {
    %c1_i32 = arith.constant 1 : i32
    %0 = arith.muli %arg0, %c1_i32 : i32
    %1 = arith.addi %0, %arg1 : i32
    %c0_i32 = arith.constant 0 : i32
    %2 = arith.minsi %1, %c0_i32 : i32
    %c0_i32_0 = arith.constant 0 : i32
    %c0_i32_1 = arith.constant 0 : i32
    return %c0_i32_0, %2 : i32, i32
  }
}

</mosaic_0001>

<llo_original>
// kernel: tpu_custom_call.1
$region0: #{tpu_custom_call.1}
  #allocation0 [shape = 'u32[]', space=smem, size = 0x4, offset = 0x4, fixed_abs, tag = 'smem constant byte address 0x4 - core index']
  #allocation1 [shape = 'u32[72,128]{1,0:T(1,128)}', space=vmem, size = 0x9000, scoped, tag = 'internal scratch']
  %s0 = inlined_call_operand.hbm [shape: s32[1,32], index: 0, kind: input, shape index: {}]
  %s1 = inlined_call_operand.vmem [shape: f32[32,32], index: 1, kind: input, shape index: {}]
  %s2 = inlined_call_operand.vmem [shape: f32[32,16], index: 2, kind: input, shape index: {}]
  %s3 = inlined_call_operand.vmem [shape: f32[16,32], index: 3, kind: input, shape index: {}]
  %s4 = inlined_call_operand.hbm [shape: f32[16,32], index: 4, kind: input, shape index: {}]
  %s5 = inlined_call_operand.vmem [shape: f32[32,32], index: 5, kind: input, shape index: {}]
  %s6 = inlined_call_operand.hbm [shape: f32[2,2,32,32], index: 6, kind: input, shape index: {}]
  %s7 = inlined_call_operand.vmem [shape: f32[32,4], index: 7, kind: input, shape index: {}]
  %s8 = inlined_call_operand.hbm [shape: f32[8,32], index: 8, kind: output, shape index: {0}]
  %s9 = inlined_call_operand.hbm [shape: f32[4,32], index: 9, kind: output, shape index: {1}]
  %10 = xla_tuple %s8, %s9
  %s11 = sld [smem:[#allocation0]]
  $region66: #{tpu_custom_call.1} parent=0
    _
  %s13 = ssub.s32 1, %s11
  %s14 = scalar_select 0, %s13, %s11
  $region1: #{tpu_custom_call.1} parent=0
    #allocation2 [shape = 'u8[512]{0}', space=vmem, size = 0x400, scoped, tag = 'input window, operand 0, single buffered']
    #allocation3 [shape = 's32[1]{0}', space=sflag, size = 0x4, scoped, tag = 'scoped memory for tpu_custom_call.1']
    #allocation4 [shape = 's32[1]{0}', space=sflag, size = 0x4, scoped, tag = 'scoped memory for tpu_custom_call.1']
    #allocation5 [shape = 'u8[8192]{0}', space=vmem, size = 0x2000, scoped, tag = 'input window, operand 4, single buffered']
    #allocation6 [shape = 's32[1]{0}', space=sflag, size = 0x4, scoped, tag = 'scoped memory for tpu_custom_call.1']
    #allocation7 [shape = 'u8[65536]{0}', space=vmem, size = 0x10000, scoped, tag = 'input window, operand 6, single buffered']
    #allocation8 [shape = 'u8[4096]{0}', space=vmem, size = 0x1000, scoped, tag = 'output window, operand 0, single buffered']
    #allocation9 [shape = 'u8[2048]{0}', space=vmem, size = 0x800, scoped, tag = 'output window, operand 1, single buffered']
    #allocation10 [shape = 's32[1]{0}', space=sflag, size = 0x4, scoped, tag = 'scoped memory for tpu_custom_call.1']
    %15 = vsyncpa [#allocation3], 0
    %16 = vsyncpa [#allocation6], 0
    %17 = vsyncpa [#allocation4], 0
    %18 = vsyncpa [#allocation10], 0
    // Predicated region
    $region2: #{tpu_custom_call.1} parent=1 // pred_check
      _
    $region3: #{tpu_custom_call.1} parent=1 // pred_check_branch
      %20 = sbr.rel (0) target = $region5
    $region4: #{tpu_custom_call.1} parent=1 // pred_region
      %s21 = sadd.s32 0, 0
      %p22 = scmp.lt.s32.totalorder %s21, 0
      %s23 = scalar_select %p22, %s21, 0
      %25 = vsyncadd [#allocation3], 0
      %s26 = scalar_lea.hbm %s0, %s23
      %s28 = sshll.u32 %s26, 4
      %s29 = int_to_ptr.hbm [resolvable:$true] %s28
      %s30 = sshll.u32 [#allocation2], 4
      %s31 = int_to_ptr.vmem [resolvable:$true] %s30
      %33 = dma.hbm_to_vmem [thread:$0]  %s29, 16, %s31, [#allocation3]
    $region5: #{tpu_custom_call.1} parent=1 // pred_fallthru
      _
    // Predicated region
    $region6: #{tpu_custom_call.1} parent=1 // pred_check
      _
    $region7: #{tpu_custom_call.1} parent=1 // pred_check_branch
      %35 = sbr.rel (0) target = $region9
    $region8: #{tpu_custom_call.1} parent=1 // pred_region
      %s36 = sadd.s32 0, 0
      %p37 = scmp.lt.s32.totalorder %s36, 0
      %s38 = scalar_select %p37, %s36, 0
      %s39 = smul.u32 4, %s38
      %p40 = scmp.lt.s32.totalorder %s39, 3
      %s41 = scalar_select %p40, %s39, 3
      %s42 = smul.addr %s41, 8
      %s43 = scalar_lea.vmem %s1, %s42
      %s44 = sadd.s32 0, 0
      %p45 = scmp.lt.s32.totalorder %s44, 0
      %s46 = scalar_select %p45, %s44, 0
      %s47 = smul.u32 4, %s46
    $region9: #{tpu_custom_call.1} parent=1 // pred_fallthru
      _
    // Predicated region
    $region10: #{tpu_custom_call.1} parent=1 // pred_check
      _
    $region11: #{tpu_custom_call.1} parent=1 // pred_check_branch
      %49 = sbr.rel (0) target = $region13
    $region12: #{tpu_custom_call.1} parent=1 // pred_region
      %s50 = sadd.s32 0, 0
      %p51 = scmp.lt.s32.totalorder %s50, 0
      %s52 = scalar_select %p51, %s50, 0
      %s53 = smul.u32 4, %s52
      %p54 = scmp.lt.s32.totalorder %s53, 3
      %s55 = scalar_select %p54, %s53, 3
      %s56 = smul.addr %s55, 8
      %s57 = scalar_lea.vmem %s2, %s56
      %s58 = sadd.s32 0, 0
      %p59 = scmp.lt.s32.totalorder %s58, 0
      %s60 = scalar_select %p59, %s58, 0
      %s61 = smul.u32 4, %s60
    $region13: #{tpu_custom_call.1} parent=1 // pred_fallthru
      _
    // Predicated region
    $region14: #{tpu_custom_call.1} parent=1 // pred_check
      _
    $region15: #{tpu_custom_call.1} parent=1 // pred_check_branch
      %63 = sbr.rel (0) target = $region17
    $region16: #{tpu_custom_call.1} parent=1 // pred_region
      _
    $region17: #{tpu_custom_call.1} parent=1 // pred_fallthru
      _
    // Predicated region
    $region18: #{tpu_custom_call.1} parent=1 // pred_check
      _
    $region19: #{tpu_custom_call.1} parent=1 // pred_check_branch
      %65 = sbr.rel (0) target = $region21
    $region20: #{tpu_custom_call.1} parent=1 // pred_region
      %67 = vsyncadd [#allocation6], 0
      %s68 = sshll.u32 %s4, 4
      %s69 = int_to_ptr.hbm [resolvable:$true] %s68
      %s70 = sshll.u32 [#allocation5], 4
      %s71 = int_to_ptr.vmem [resolvable:$true] %s70
      %76 = dma.hbm_to_vmem [thread:$0]  %s69, 256, %s71, [#allocation6], 128, 128, 8
    $region21: #{tpu_custom_call.1} parent=1 // pred_fallthru
      _
    // Predicated region
    $region22: #{tpu_custom_call.1} parent=1 // pred_check
      _
    $region23: #{tpu_custom_call.1} parent=1 // pred_check_branch
      %78 = sbr.rel (0) target = $region25
    $region24: #{tpu_custom_call.1} parent=1 // pred_region
      _
    $region25: #{tpu_custom_call.1} parent=1 // pred_fallthru
      _
    // Predicated region
    $region26: #{tpu_custom_call.1} parent=1 // pred_check
      _
    $region27: #{tpu_custom_call.1} parent=1 // pred_check_branch
      %80 = sbr.rel (0) target = $region29
    $region28: #{tpu_custom_call.1} parent=1 // pred_region
      %82 = vsyncadd [#allocation6], 0
      %s83 = sshll.u32 %s6, 4
      %s84 = int_to_ptr.hbm [resolvable:$true] %s83
      %s85 = sshll.u32 [#allocation7], 4
      %s86 = int_to_ptr.vmem [resolvable:$true] %s85
      %91 = dma.hbm_to_vmem [thread:$0]  %s84, 2048, %s86, [#allocation6], 128, 128, 8
    $region29: #{tpu_custom_call.1} parent=1 // pred_fallthru
      _
    // Predicated region
    $region30: #{tpu_custom_call.1} parent=1 // pred_check
      _
    $region31: #{tpu_custom_call.1} parent=1 // pred_check_branch
      %93 = sbr.rel (0) target = $region33
    $region32: #{tpu_custom_call.1} parent=1 // pred_region
      _
    $region33: #{tpu_custom_call.1} parent=1 // pred_fallthru
      _
    // Predicated region
    $region34: #{tpu_custom_call.1} parent=1 // pred_check
      _
    $region35: #{tpu_custom_call.1} parent=1 // pred_check_branch
      %95 = sbr.rel (0) target = $region37
    $region36: #{tpu_custom_call.1} parent=1 // pred_region
      %97 = dma.done [#allocation3], 16
    $region37: #{tpu_custom_call.1} parent=1 // pred_fallthru
      _
    // Predicated region
    $region38: #{tpu_custom_call.1} parent=1 // pred_check
      _
    $region39: #{tpu_custom_call.1} parent=1 // pred_check_branch
      %99 = sbr.rel (0) target = $region41
    $region40: #{tpu_custom_call.1} parent=1 // pred_region
      %101 = dma.done [#allocation6], 256
    $region41: #{tpu_custom_call.1} parent=1 // pred_fallthru
      _
    // Predicated region
    $region42: #{tpu_custom_call.1} parent=1 // pred_check
      _
    $region43: #{tpu_custom_call.1} parent=1 // pred_check_branch
      %103 = sbr.rel (0) target = $region45
    $region44: #{tpu_custom_call.1} parent=1 // pred_region
      %105 = dma.done [#allocation6], 2048
    $region45: #{tpu_custom_call.1} parent=1 // pred_fallthru
      _
    %s106 = sadd.s32 0, 0
    %p107 = scmp.lt.s32.totalorder %s106, 0
    %s108 = scalar_select %p107, %s106, 0
    %s109 = smul.u32 4, %s108
    %p110 = scmp.lt.s32.totalorder %s109, 3
    %s111 = scalar_select %p110, %s109, 3
    %s112 = smul.addr %s111, 8
    %s113 = scalar_lea.vmem %s1, %s112
    %s114 = sadd.s32 0, 0
    %p115 = scmp.lt.s32.totalorder %s114, 0
    %s116 = scalar_select %p115, %s114, 0
    %s117 = smul.u32 4, %s116
    %p118 = scmp.lt.s32.totalorder %s117, 3
    %s119 = scalar_select %p118, %s117, 3
    %s120 = smul.addr %s119, 8
    %s121 = scalar_lea.vmem %s2, %s120
    %s122 = sadd.s32 0, 0
    %p123 = scmp.lt.s32.totalorder %s122, 0
    %s124 = scalar_select %p123, %s122, 0
    %s125 = sadd.s32 0, 0
    %p126 = scmp.lt.s32.totalorder %s125, 0
    %s127 = scalar_select %p126, %s125, 0
    %s128 = smul.u32 4, %s127
    %p129 = scmp.lt.s32.totalorder %s128, 3
    %s130 = scalar_select %p129, %s128, 3
    %s131 = smul.addr %s130, 8
    %s132 = scalar_lea.vmem %s1, %s131
    %s133 = sadd.s32 0, 0
    %p134 = scmp.lt.s32.totalorder %s133, 0
    %s135 = scalar_select %p134, %s133, 0
    %s136 = smul.u32 4, %s135
    %s137 = sadd.s32 0, 0
    %p138 = scmp.lt.s32.totalorder %s137, 0
    %s139 = scalar_select %p138, %s137, 0
    %s140 = smul.u32 4, %s139
    %p141 = scmp.lt.s32.totalorder %s140, 3
    %s142 = scalar_select %p141, %s140, 3
    %s143 = smul.addr %s142, 8
    %s144 = scalar_lea.vmem %s2, %s143
    %s145 = sadd.s32 0, 0
    %p146 = scmp.lt.s32.totalorder %s145, 0
    %s147 = scalar_select %p146, %s145, 0
    %s148 = smul.u32 4, %s147
    %s149 = sadd.s32 0, 0
    %p150 = scmp.lt.s32.totalorder %s149, 0
    %s151 = scalar_select %p150, %s149, 0
    %p152 = scmp.eq.s32.totalorder 0, 0
    // Predicated region
    $region46: #{tpu_custom_call.1} parent=1 // pred_check
      %p153 = pneg %p152
    $region47: #{tpu_custom_call.1} parent=1 // pred_check_branch
      %155 = sbr.rel (%p153) target = $region49
    $region48: #{tpu_custom_call.1} parent=1 // pred_region
      %vm156 = vcmask 261120
      %157 = vst.msk [vmem:[#allocation8] sm:$0xff] %vm156, 0.0
    $region49: #{tpu_custom_call.1} parent=1 // pred_fallthru
      _
    %v158 = vld [vmem:[%s132] sm:$0xff]
    %v159 = vld [vmem:[%s132 + $0x8] sm:$0xff]
    %v160 = vld [vmem:[%s132 + $0x10] sm:$0xff]
    %v161 = vld [vmem:[%s132 + $0x18] sm:$0xff]
    %v162 = vld [vmem:[%s144] sm:$0xff]
    %v163 = vld [vmem:[%s144 + $0x8] sm:$0xff]
    %v164 = vld [vmem:[%s144 + $0x10] sm:$0xff]
    %v165 = vld [vmem:[%s144 + $0x18] sm:$0xff]
    %v166 = vld [vmem:[%s3] sm:$0xff]
    %v167 = vld [vmem:[%s3 + $0x8] sm:$0xff]
    %vm168 = vcmask 130048
    %v170 = vsel %vm168, %v162, 0
    %v173 = vsel %vm168, %v163, 0
    %v176 = vsel %vm168, %v164, 0
    %v179 = vsel %vm168, %v165, 0
    %181 = vmatpush.msra.mxu0 0.0
    %182 = vmatpush.msra.mxu0 0.0
    %183 = vmatpush.msra.mxu0 0.0
    %184 = vmatpush.msra.mxu0 0.0
    %185 = vmatpush.msra.mxu0 0.0
    %186 = vmatpush.msra.mxu0 0.0
    %187 = vmatpush.msra.mxu0 0.0
    %188 = vmatpush.msra.mxu0 0.0
    %189 = vmatpush.msra.mxu0 0.0
    %190 = vmatpush.msra.mxu0 0.0
    %191 = vmatpush.msra.mxu0 0.0
    %192 = vmatpush.msra.mxu0 0.0
    %193 = vmatpush.msra.mxu0 0.0
    %194 = vmatpush.msra.mxu0 0.0
    %195 = vmatpush.msra.mxu0 %v167
    %196 = vmatpush.msra.mxu0 %v166
    %197 = vmatmul.f32.gmra.mxu0 %v170
    %v198 = vpop.f32.mrf.mxu0
    %v199 = vadd.f32 0.0, %v198
    %200 = vmatmul.f32.gmra.mxu0 %v173
    %v201 = vpop.f32.mrf.mxu0
    %v202 = vadd.f32 0.0, %v201
    %203 = vmatmul.f32.gmra.mxu0 %v176
    %v204 = vpop.f32.mrf.mxu0
    %v205 = vadd.f32 0.0, %v204
    %206 = vmatmul.f32.gmra.mxu0 %v179
    %v207 = vpop.f32.mrf.mxu0
    %v208 = vadd.f32 0.0, %v207
    %209 = vdwg.mxu0
    %v210 = vmul.f32 %v158, %v199
    %v211 = vmul.f32 %v159, %v202
    %v212 = vmul.f32 %v160, %v205
    %v213 = vmul.f32 %v161, %v208
    %v214 = vld [vmem:[#allocation2] sm:$0x1]
    %v215 = vlaneseq
    %v216 = vshrl.u32 %v215, 7
    %v217 = vperm.slane %v214, 0
    %vm218 = vcmp.eq.s32.totalorder %v217, %v216
    %v219 = vsel %vm218, 1, 0
    %v220 = vcvt.s32.f32 %v219
    %v221 = vld [vmem:[#allocation8] sm:$0xff]
    %vm222 = vcmask 261120
    %v224 = vsel %vm222, %v220, 0
    %226 = vmatpush.msra.mxu0 0.0
    %227 = vmatpush.msra.mxu0 0.0
    %228 = vmatpush.msra.mxu0 0.0
    %229 = vmatpush.msra.mxu0 0.0
    %230 = vmatpush.msra.mxu0 0.0
    %231 = vmatpush.msra.mxu0 0.0
    %232 = vmatpush.msra.mxu0 0.0
    %233 = vmatpush.msra.mxu0 0.0
    %234 = vmatpush.msra.mxu0 0.0
    %235 = vmatpush.msra.mxu0 0.0
    %236 = vmatpush.msra.mxu0 0.0
    %237 = vmatpush.msra.mxu0 0.0
    %238 = vmatpush.msra.mxu0 %v213
    %239 = vmatpush.msra.mxu0 %v212
    %240 = vmatpush.msra.mxu0 %v211
    %241 = vmatpush.msra.mxu0 %v210
    %242 = vmatmul.f32.gmra.mxu0 %v224
    %v243 = vpop.f32.mrf.mxu0
    %v244 = vadd.f32 0.0, %v243
    %245 = vdwg.mxu0
    %v246 = vadd.f32 %v221, %v244
    %247 = vst.msk [vmem:[#allocation8] sm:$0xff] %vm222, %v246
    %v248 = vld [vmem:[%s5] sm:$0xff]
    %v249 = vld [vmem:[%s5 + $0x8] sm:$0xff]
    %v250 = vld [vmem:[%s5 + $0x10] sm:$0xff]
    %v251 = vld [vmem:[%s5 + $0x18] sm:$0xff]
    %v253 = vsel %vm222, %v158, 0
    %v256 = vsel %vm222, %v159, 0
    %v259 = vsel %vm222, %v160, 0
    %v262 = vsel %vm222, %v161, 0
    %264 = vmatpush.msra.mxu0 0.0
    %265 = vmatpush.msra.mxu0 0.0
    %266 = vmatpush.msra.mxu0 0.0
    %267 = vmatpush.msra.mxu0 0.0
    %268 = vmatpush.msra.mxu0 0.0
    %269 = vmatpush.msra.mxu0 0.0
    %270 = vmatpush.msra.mxu0 0.0
    %271 = vmatpush.msra.mxu0 0.0
    %272 = vmatpush.msra.mxu0 0.0
    %273 = vmatpush.msra.mxu0 0.0
    %274 = vmatpush.msra.mxu0 0.0
    %275 = vmatpush.msra.mxu0 0.0
    %276 = vmatpush.msra.mxu0 %v251
    %277 = vmatpush.msra.mxu0 %v250
    %278 = vmatpush.msra.mxu0 %v249
    %279 = vmatpush.msra.mxu0 %v248
    %280 = vmatmul.f32.gmra.mxu0 %v253
    %v281 = vpop.f32.mrf.mxu0
    %v282 = vadd.f32 0.0, %v281
    %283 = vmatmul.f32.gmra.mxu0 %v256
    %v284 = vpop.f32.mrf.mxu0
    %v285 = vadd.f32 0.0, %v284
    %286 = vmatmul.f32.gmra.mxu0 %v259
    %v287 = vpop.f32.mrf.mxu0
    %v288 = vadd.f32 0.0, %v287
    %289 = vmatmul.f32.gmra.mxu0 %v262
    %v290 = vpop.f32.mrf.mxu0
    %v291 = vadd.f32 0.0, %v290
    %292 = vdwg.mxu0
    %v293 = vxor.u32 %v282, 2147483648
    %v294 = vxor.u32 %v285, 2147483648
    %v295 = vxor.u32 %v288, 2147483648
    %v296 = vxor.u32 %v291, 2147483648
    %v297 = vmul.f32 %v293, 1.442695
    %v298 = vpow.pop %v297
    %v299 = vmul.f32 %v294, 1.442695
    %v300 = vpow.pop %v299
    %v301 = vmul.f32 %v295, 1.442695
    %v302 = vpow.pop %v301
    %v303 = vmul.f32 %v296, 1.442695
    %v304 = vpow.pop %v303
    %v305 = vadd.f32 %v298, 1.0
    %v306 = vadd.f32 %v300, 1.0
    %v307 = vadd.f32 %v302, 1.0
    %v308 = vadd.f32 %v304, 1.0
    %v309 = vrcp.pop %v305
    %v310 = vmul.f32 %v305, %v309
    %v311 = vsub.f32 1.0, %v310
    %v312 = vmul.f32 %v309, %v311
    %v313 = vadd.f32 %v309, %v312
    %vm314 = vweird.f32 %v305
    %vm315 = vweird.f32 %v309
    %vm316 = vmor %vm314, %vm315
    %v317 = vsel %vm316, %v309, %v313
    %v318 = vand.u32 2147483647, %v305
    %vm319 = vcmp.eq.f32.partialorder %v318, 8.507059e+37
    %v320 = vand.u32 %v305, 2147483648
    %v321 = vor.u32 1.1754944e-38, %v320
    %v322 = vsel %vm319, %v321, %v317
    %v323 = vmul.f32 1.0, %v322
    %v324 = vrcp.pop %v306
    %v325 = vmul.f32 %v306, %v324
    %v326 = vsub.f32 1.0, %v325
    %v327 = vmul.f32 %v324, %v326
    %v328 = vadd.f32 %v324, %v327
    %vm329 = vweird.f32 %v306
    %vm330 = vweird.f32 %v324
    %vm331 = vmor %vm329, %vm330
    %v332 = vsel %vm331, %v324, %v328
    %v333 = vand.u32 2147483647, %v306
    %vm334 = vcmp.eq.f32.partialorder %v333, 8.507059e+37
    %v335 = vand.u32 %v306, 2147483648
    %v336 = vor.u32 1.1754944e-38, %v335
    %v337 = vsel %vm334, %v336, %v332
    %v338 = vmul.f32 1.0, %v337
    %v339 = vrcp.pop %v307
    %v340 = vmul.f32 %v307, %v339
    %v341 = vsub.f32 1.0, %v340
    %v342 = vmul.f32 %v339, %v341
    %v343 = vadd.f32 %v339, %v342
    %vm344 = vweird.f32 %v307
    %vm345 = vweird.f32 %v339
    %vm346 = vmor %vm344, %vm345
    %v347 = vsel %vm346, %v339, %v343
    %v348 = vand.u32 2147483647, %v307
    %vm349 = vcmp.eq.f32.partialorder %v348, 8.507059e+37
    %v350 = vand.u32 %v307, 2147483648
    %v351 = vor.u32 1.1754944e-38, %v350
    %v352 = vsel %vm349, %v351, %v347
    %v353 = vmul.f32 1.0, %v352
    %v354 = vrcp.pop %v308
    %v355 = vmul.f32 %v308, %v354
    %v356 = vsub.f32 1.0, %v355
    %v357 = vmul.f32 %v354, %v356
    %v358 = vadd.f32 %v354, %v357
    %vm359 = vweird.f32 %v308
    %vm360 = vweird.f32 %v354
    %vm361 = vmor %vm359, %vm360
    %v362 = vsel %vm361, %v354, %v358
    %v363 = vand.u32 2147483647, %v308
    %vm364 = vcmp.eq.f32.partialorder %v363, 8.507059e+37
    %v365 = vand.u32 %v308, 2147483648
    %v366 = vor.u32 1.1754944e-38, %v365
    %v367 = vsel %vm364, %v366, %v362
    %v368 = vmul.f32 1.0, %v367
    %v369 = vmul.f32 %v282, %v323
    %v370 = vmul.f32 %v285, %v338
    %v371 = vmul.f32 %v288, %v353
    %v372 = vmul.f32 %v291, %v368
    %v373 = vmul.f32 %v369, 1.6666666
    %v374 = vmul.f32 %v370, 1.6666666
    %v375 = vmul.f32 %v371, 1.6666666
    %v376 = vmul.f32 %v372, 1.6666666
    %v377 = vld [vmem:[#allocation7] sm:$0xff]
    %v378 = vld [vmem:[#allocation7 + $0x8] sm:$0xff]
    %v379 = vld [vmem:[#allocation7 + $0x10] sm:$0xff]
    %v380 = vld [vmem:[#allocation7 + $0x18] sm:$0xff]
    %v382 = vsel %vm222, %v373, 0
    %v385 = vsel %vm222, %v374, 0
    %v388 = vsel %vm222, %v375, 0
    %v391 = vsel %vm222, %v376, 0
    %393 = vmatpush.msra.mxu0 0.0
    %394 = vmatpush.msra.mxu0 0.0
    %395 = vmatpush.msra.mxu0 0.0
    %396 = vmatpush.msra.mxu0 0.0
    %397 = vmatpush.msra.mxu0 0.0
    %398 = vmatpush.msra.mxu0 0.0
    %399 = vmatpush.msra.mxu0 0.0
    %400 = vmatpush.msra.mxu0 0.0
    %401 = vmatpush.msra.mxu0 0.0
    %402 = vmatpush.msra.mxu0 0.0
    %403 = vmatpush.msra.mxu0 0.0
    %404 = vmatpush.msra.mxu0 0.0
    %405 = vmatpush.msra.mxu0 %v380
    %406 = vmatpush.msra.mxu0 %v379
    %407 = vmatpush.msra.mxu0 %v378
    %408 = vmatpush.msra.mxu0 %v377
    %409 = vmatmul.f32.gmra.mxu0 %v382
    %v410 = vpop.f32.mrf.mxu0
    %v411 = vadd.f32 0.0, %v410
    %412 = vmatmul.f32.gmra.mxu0 %v385
    %v413 = vpop.f32.mrf.mxu0
    %v414 = vadd.f32 0.0, %v413
    %415 = vmatmul.f32.gmra.mxu0 %v388
    %v416 = vpop.f32.mrf.mxu0
    %v417 = vadd.f32 0.0, %v416
    %418 = vmatmul.f32.gmra.mxu0 %v391
    %v419 = vpop.f32.mrf.mxu0
    %v420 = vadd.f32 0.0, %v419
    %421 = vdwg.mxu0
    %v422 = vxor.u32 %v411, 2147483648
    %v423 = vxor.u32 %v414, 2147483648
    %v424 = vxor.u32 %v417, 2147483648
    %v425 = vxor.u32 %v420, 2147483648
    %v426 = vmul.f32 %v422, 1.442695
    %v427 = vpow.pop %v426
    %v428 = vmul.f32 %v423, 1.442695
    %v429 = vpow.pop %v428
    %v430 = vmul.f32 %v424, 1.442695
    %v431 = vpow.pop %v430
    %v432 = vmul.f32 %v425, 1.442695
    %v433 = vpow.pop %v432
    %v434 = vadd.f32 %v427, 1.0
    %v435 = vadd.f32 %v429, 1.0
    %v436 = vadd.f32 %v431, 1.0
    %v437 = vadd.f32 %v433, 1.0
    %v438 = vrcp.pop %v434
    %v439 = vmul.f32 %v434, %v438
    %v440 = vsub.f32 1.0, %v439
    %v441 = vmul.f32 %v438, %v440
    %v442 = vadd.f32 %v438, %v441
    %vm443 = vweird.f32 %v434
    %vm444 = vweird.f32 %v438
    %vm445 = vmor %vm443, %vm444
    %v446 = vsel %vm445, %v438, %v442
    %v447 = vand.u32 2147483647, %v434
    %vm448 = vcmp.eq.f32.partialorder %v447, 8.507059e+37
    %v449 = vand.u32 %v434, 2147483648
    %v450 = vor.u32 1.1754944e-38, %v449
    %v451 = vsel %vm448, %v450, %v446
    %v452 = vmul.f32 1.0, %v451
    %v453 = vrcp.pop %v435
    %v454 = vmul.f32 %v435, %v453
    %v455 = vsub.f32 1.0, %v454
    %v456 = vmul.f32 %v453, %v455
    %v457 = vadd.f32 %v453, %v456
    %vm458 = vweird.f32 %v435
    %vm459 = vweird.f32 %v453
    %vm460 = vmor %vm458, %vm459
    %v461 = vsel %vm460, %v453, %v457
    %v462 = vand.u32 2147483647, %v435
    %vm463 = vcmp.eq.f32.partialorder %v462, 8.507059e+37
    %v464 = vand.u32 %v435, 2147483648
    %v465 = vor.u32 1.1754944e-38, %v464
    %v466 = vsel %vm463, %v465, %v461
    %v467 = vmul.f32 1.0, %v466
    %v468 = vrcp.pop %v436
    %v469 = vmul.f32 %v436, %v468
    %v470 = vsub.f32 1.0, %v469
    %v471 = vmul.f32 %v468, %v470
    %v472 = vadd.f32 %v468, %v471
    %vm473 = vweird.f32 %v436
    %vm474 = vweird.f32 %v468
    %vm475 = vmor %vm473, %vm474
    %v476 = vsel %vm475, %v468, %v472
    %v477 = vand.u32 2147483647, %v436
    %vm478 = vcmp.eq.f32.partialorder %v477, 8.507059e+37
    %v479 = vand.u32 %v436, 2147483648
    %v480 = vor.u32 1.1754944e-38, %v479
    %v481 = vsel %vm478, %v480, %v476
    %v482 = vmul.f32 1.0, %v481
    %v483 = vrcp.pop %v437
    %v484 = vmul.f32 %v437, %v483
    %v485 = vsub.f32 1.0, %v484
    %v486 = vmul.f32 %v483, %v485
    %v487 = vadd.f32 %v483, %v486
    %vm488 = vweird.f32 %v437
    %vm489 = vweird.f32 %v483
    %vm490 = vmor %vm488, %vm489
    %v491 = vsel %vm490, %v483, %v487
    %v492 = vand.u32 2147483647, %v437
    %vm493 = vcmp.eq.f32.partialorder %v492, 8.507059e+37
    %v494 = vand.u32 %v437, 2147483648
    %v495 = vor.u32 1.1754944e-38, %v494
    %v496 = vsel %vm493, %v495, %v491
    %v497 = vmul.f32 1.0, %v496
    %v498 = vmul.f32 %v411, %v452
    %v499 = vmul.f32 %v414, %v467
    %v500 = vmul.f32 %v417, %v482
    %v501 = vmul.f32 %v420, %v497
    %v502 = vmul.f32 %v498, 1.6666666
    %v503 = vmul.f32 %v499, 1.6666666
    %v504 = vmul.f32 %v500, 1.6666666
    %v505 = vmul.f32 %v501, 1.6666666
    %s506 = scalar_lea.vmem [#allocation7], 32
    %v507 = vld [vmem:[%s506] sm:$0xff]
    %v508 = vld [vmem:[%s506 + $0x8] sm:$0xff]
    %v509 = vld [vmem:[%s506 + $0x10] sm:$0xff]
    %v510 = vld [vmem:[%s506 + $0x18] sm:$0xff]
    %v512 = vsel %vm222, %v502, 0
    %v515 = vsel %vm222, %v503, 0
    %v518 = vsel %vm222, %v504, 0
    %v521 = vsel %vm222, %v505, 0
    %523 = vmatpush.msra.mxu0 0.0
    %524 = vmatpush.msra.mxu0 0.0
    %525 = vmatpush.msra.mxu0 0.0
    %526 = vmatpush.msra.mxu0 0.0
    %527 = vmatpush.msra.mxu0 0.0
    %528 = vmatpush.msra.mxu0 0.0
    %529 = vmatpush.msra.mxu0 0.0
    %530 = vmatpush.msra.mxu0 0.0
    %531 = vmatpush.msra.mxu0 0.0
    %532 = vmatpush.msra.mxu0 0.0
    %533 = vmatpush.msra.mxu0 0.0
    %534 = vmatpush.msra.mxu0 0.0
    %535 = vmatpush.msra.mxu0 %v510
    %536 = vmatpush.msra.mxu0 %v509
    %537 = vmatpush.msra.mxu0 %v508
    %538 = vmatpush.msra.mxu0 %v507
    %539 = vmatmul.f32.gmra.mxu0 %v512
    %v540 = vpop.f32.mrf.mxu0
    %v541 = vadd.f32 0.0, %v540
    %542 = vmatmul.f32.gmra.mxu0 %v515
    %v543 = vpop.f32.mrf.mxu0
    %v544 = vadd.f32 0.0, %v543
    %545 = vmatmul.f32.gmra.mxu0 %v518
    %v546 = vpop.f32.mrf.mxu0
    %v547 = vadd.f32 0.0, %v546
    %548 = vmatmul.f32.gmra.mxu0 %v521
    %v549 = vpop.f32.mrf.mxu0
    %v550 = vadd.f32 0.0, %v549
    %551 = vdwg.mxu0
    %v552 = vxor.u32 %v541, 2147483648
    %v553 = vxor.u32 %v544, 2147483648
    %v554 = vxor.u32 %v547, 2147483648
    %v555 = vxor.u32 %v550, 2147483648
    %v556 = vmul.f32 %v552, 1.442695
    %v557 = vpow.pop %v556
    %v558 = vmul.f32 %v553, 1.442695
    %v559 = vpow.pop %v558
    %v560 = vmul.f32 %v554, 1.442695
    %v561 = vpow.pop %v560
    %v562 = vmul.f32 %v555, 1.442695
    %v563 = vpow.pop %v562
    %v564 = vadd.f32 %v557, 1.0
    %v565 = vadd.f32 %v559, 1.0
    %v566 = vadd.f32 %v561, 1.0
    %v567 = vadd.f32 %v563, 1.0
    %v568 = vrcp.pop %v564
    %v569 = vmul.f32 %v564, %v568
    %v570 = vsub.f32 1.0, %v569
    %v571 = vmul.f32 %v568, %v570
    %v572 = vadd.f32 %v568, %v571
    %vm573 = vweird.f32 %v564
    %vm574 = vweird.f32 %v568
    %vm575 = vmor %vm573, %vm574
    %v576 = vsel %vm575, %v568, %v572
    %v577 = vand.u32 2147483647, %v564
    %vm578 = vcmp.eq.f32.partialorder %v577, 8.507059e+37
    %v579 = vand.u32 %v564, 2147483648
    %v580 = vor.u32 1.1754944e-38, %v579
    %v581 = vsel %vm578, %v580, %v576
    %v582 = vmul.f32 1.0, %v581
    %v583 = vrcp.pop %v565
    %v584 = vmul.f32 %v565, %v583
    %v585 = vsub.f32 1.0, %v584
    %v586 = vmul.f32 %v583, %v585
    %v587 = vadd.f32 %v583, %v586
    %vm588 = vweird.f32 %v565
    %vm589 = vweird.f32 %v583
    %vm590 = vmor %vm588, %vm589
    %v591 = vsel %vm590, %v583, %v587
    %v592 = vand.u32 2147483647, %v565
    %vm593 = vcmp.eq.f32.partialorder %v592, 8.507059e+37
    %v594 = vand.u32 %v565, 2147483648
    %v595 = vor.u32 1.1754944e-38, %v594
    %v596 = vsel %vm593, %v595, %v591
    %v597 = vmul.f32 1.0, %v596
    %v598 = vrcp.pop %v566
    %v599 = vmul.f32 %v566, %v598
    %v600 = vsub.f32 1.0, %v599
    %v601 = vmul.f32 %v598, %v600
    %v602 = vadd.f32 %v598, %v601
    %vm603 = vweird.f32 %v566
    %vm604 = vweird.f32 %v598
    %vm605 = vmor %vm603, %vm604
    %v606 = vsel %vm605, %v598, %v602
    %v607 = vand.u32 2147483647, %v566
    %vm608 = vcmp.eq.f32.partialorder %v607, 8.507059e+37
    %v609 = vand.u32 %v566, 2147483648
    %v610 = vor.u32 1.1754944e-38, %v609
    %v611 = vsel %vm608, %v610, %v606
    %v612 = vmul.f32 1.0, %v611
    %v613 = vrcp.pop %v567
    %v614 = vmul.f32 %v567, %v613
    %v615 = vsub.f32 1.0, %v614
    %v616 = vmul.f32 %v613, %v615
    %v617 = vadd.f32 %v613, %v616
    %vm618 = vweird.f32 %v567
    %vm619 = vweird.f32 %v613
    %vm620 = vmor %vm618, %vm619
    %v621 = vsel %vm620, %v613, %v617
    %v622 = vand.u32 2147483647, %v567
    %vm623 = vcmp.eq.f32.partialorder %v622, 8.507059e+37
    %v624 = vand.u32 %v567, 2147483648
    %v625 = vor.u32 1.1754944e-38, %v624
    %v626 = vsel %vm623, %v625, %v621
    %v627 = vmul.f32 1.0, %v626
    %v628 = vmul.f32 %v541, %v582
    %v629 = vmul.f32 %v544, %v597
    %v630 = vmul.f32 %v547, %v612
    %v631 = vmul.f32 %v550, %v627
    %v632 = vmul.f32 %v628, 1.6666666
    %v633 = vmul.f32 %v629, 1.6666666
    %v634 = vmul.f32 %v630, 1.6666666
    %v635 = vmul.f32 %v631, 1.6666666
    %v636 = vadd.f32 %v373, %v632
    %v637 = vadd.f32 %v374, %v633
    %v638 = vadd.f32 %v375, %v634
    %v639 = vadd.f32 %v376, %v635
    %v640 = vmul.f32 %v636, 0.70710677
    %v641 = vmul.f32 %v637, 0.70710677
    %v642 = vmul.f32 %v638, 0.70710677
    %v643 = vmul.f32 %v639, 0.70710677
    %s644 = scalar_lea.vmem [#allocation7], 64
    %v645 = vld [vmem:[%s644] sm:$0xff]
    %v646 = vld [vmem:[%s644 + $0x8] sm:$0xff]
    %v647 = vld [vmem:[%s644 + $0x10] sm:$0xff]
    %v648 = vld [vmem:[%s644 + $0x18] sm:$0xff]
    %v650 = vsel %vm222, %v640, 0
    %v653 = vsel %vm222, %v641, 0
    %v656 = vsel %vm222, %v642, 0
    %v659 = vsel %vm222, %v643, 0
    %661 = vmatpush.msra.mxu0 0.0
    %662 = vmatpush.msra.mxu0 0.0
    %663 = vmatpush.msra.mxu0 0.0
    %664 = vmatpush.msra.mxu0 0.0
    %665 = vmatpush.msra.mxu0 0.0
    %666 = vmatpush.msra.mxu0 0.0
    %667 = vmatpush.msra.mxu0 0.0
    %668 = vmatpush.msra.mxu0 0.0
    %669 = vmatpush.msra.mxu0 0.0
    %670 = vmatpush.msra.mxu0 0.0
    %671 = vmatpush.msra.mxu0 0.0
    %672 = vmatpush.msra.mxu0 0.0
    %673 = vmatpush.msra.mxu0 %v648
    %674 = vmatpush.msra.mxu0 %v647
    %675 = vmatpush.msra.mxu0 %v646
    %676 = vmatpush.msra.mxu0 %v645
    %677 = vmatmul.f32.gmra.mxu0 %v650
    %v678 = vpop.f32.mrf.mxu0
    %v679 = vadd.f32 0.0, %v678
    %680 = vmatmul.f32.gmra.mxu0 %v653
    %v681 = vpop.f32.mrf.mxu0
    %v682 = vadd.f32 0.0, %v681
    %683 = vmatmul.f32.gmra.mxu0 %v656
    %v684 = vpop.f32.mrf.mxu0
    %v685 = vadd.f32 0.0, %v684
    %686 = vmatmul.f32.gmra.mxu0 %v659
    %v687 = vpop.f32.mrf.mxu0
    %v688 = vadd.f32 0.0, %v687
    %689 = vdwg.mxu0
    %v690 = vxor.u32 %v679, 2147483648
    %v691 = vxor.u32 %v682, 2147483648
    %v692 = vxor.u32 %v685, 2147483648
    %v693 = vxor.u32 %v688, 2147483648
    %v694 = vmul.f32 %v690, 1.442695
    %v695 = vpow.pop %v694
    %v696 = vmul.f32 %v691, 1.442695
    %v697 = vpow.pop %v696
    %v698 = vmul.f32 %v692, 1.442695
    %v699 = vpow.pop %v698
    %v700 = vmul.f32 %v693, 1.442695
    %v701 = vpow.pop %v700
    %v702 = vadd.f32 %v695, 1.0
    %v703 = vadd.f32 %v697, 1.0
    %v704 = vadd.f32 %v699, 1.0
    %v705 = vadd.f32 %v701, 1.0
    %v706 = vrcp.pop %v702
    %v707 = vmul.f32 %v702, %v706
    %v708 = vsub.f32 1.0, %v707
    %v709 = vmul.f32 %v706, %v708
    %v710 = vadd.f32 %v706, %v709
    %vm711 = vweird.f32 %v702
    %vm712 = vweird.f32 %v706
    %vm713 = vmor %vm711, %vm712
    %v714 = vsel %vm713, %v706, %v710
    %v715 = vand.u32 2147483647, %v702
    %vm716 = vcmp.eq.f32.partialorder %v715, 8.507059e+37
    %v717 = vand.u32 %v702, 2147483648
    %v718 = vor.u32 1.1754944e-38, %v717
    %v719 = vsel %vm716, %v718, %v714
    %v720 = vmul.f32 1.0, %v719
    %v721 = vrcp.pop %v703
    %v722 = vmul.f32 %v703, %v721
    %v723 = vsub.f32 1.0, %v722
    %v724 = vmul.f32 %v721, %v723
    %v725 = vadd.f32 %v721, %v724
    %vm726 = vweird.f32 %v703
    %vm727 = vweird.f32 %v721
    %vm728 = vmor %vm726, %vm727
    %v729 = vsel %vm728, %v721, %v725
    %v730 = vand.u32 2147483647, %v703
    %vm731 = vcmp.eq.f32.partialorder %v730, 8.507059e+37
    %v732 = vand.u32 %v703, 2147483648
    %v733 = vor.u32 1.1754944e-38, %v732
    %v734 = vsel %vm731, %v733, %v729
    %v735 = vmul.f32 1.0, %v734
    %v736 = vrcp.pop %v704
    %v737 = vmul.f32 %v704, %v736
    %v738 = vsub.f32 1.0, %v737
    %v739 = vmul.f32 %v736, %v738
    %v740 = vadd.f32 %v736, %v739
    %vm741 = vweird.f32 %v704
    %vm742 = vweird.f32 %v736
    %vm743 = vmor %vm741, %vm742
    %v744 = vsel %vm743, %v736, %v740
    %v745 = vand.u32 2147483647, %v704
    %vm746 = vcmp.eq.f32.partialorder %v745, 8.507059e+37
    %v747 = vand.u32 %v704, 2147483648
    %v748 = vor.u32 1.1754944e-38, %v747
    %v749 = vsel %vm746, %v748, %v744
    %v750 = vmul.f32 1.0, %v749
    %v751 = vrcp.pop %v705
    %v752 = vmul.f32 %v705, %v751
    %v753 = vsub.f32 1.0, %v752
    %v754 = vmul.f32 %v751, %v753
    %v755 = vadd.f32 %v751, %v754
    %vm756 = vweird.f32 %v705
    %vm757 = vweird.f32 %v751
    %vm758 = vmor %vm756, %vm757
    %v759 = vsel %vm758, %v751, %v755
    %v760 = vand.u32 2147483647, %v705
    %vm761 = vcmp.eq.f32.partialorder %v760, 8.507059e+37
    %v762 = vand.u32 %v705, 2147483648
    %v763 = vor.u32 1.1754944e-38, %v762
    %v764 = vsel %vm761, %v763, %v759
    %v765 = vmul.f32 1.0, %v764
    %v766 = vmul.f32 %v679, %v720
    %v767 = vmul.f32 %v682, %v735
    %v768 = vmul.f32 %v685, %v750
    %v769 = vmul.f32 %v688, %v765
    %v770 = vmul.f32 %v766, 1.6666666
    %v771 = vmul.f32 %v767, 1.6666666
    %v772 = vmul.f32 %v768, 1.6666666
    %v773 = vmul.f32 %v769, 1.6666666
    %s774 = scalar_lea.vmem [#allocation7], 96
    %v775 = vld [vmem:[%s774] sm:$0xff]
    %v776 = vld [vmem:[%s774 + $0x8] sm:$0xff]
    %v777 = vld [vmem:[%s774 + $0x10] sm:$0xff]
    %v778 = vld [vmem:[%s774 + $0x18] sm:$0xff]
    %v780 = vsel %vm222, %v770, 0
    %v783 = vsel %vm222, %v771, 0
    %v786 = vsel %vm222, %v772, 0
    %v789 = vsel %vm222, %v773, 0
    %791 = vmatpush.msra.mxu0 0.0
    %792 = vmatpush.msra.mxu0 0.0
    %793 = vmatpush.msra.mxu0 0.0
    %794 = vmatpush.msra.mxu0 0.0
    %795 = vmatpush.msra.mxu0 0.0
    %796 = vmatpush.msra.mxu0 0.0
    %797 = vmatpush.msra.mxu0 0.0
    %798 = vmatpush.msra.mxu0 0.0
    %799 = vmatpush.msra.mxu0 0.0
    %800 = vmatpush.msra.mxu0 0.0
    %801 = vmatpush.msra.mxu0 0.0
    %802 = vmatpush.msra.mxu0 0.0
    %803 = vmatpush.msra.mxu0 %v778
    %804 = vmatpush.msra.mxu0 %v777
    %805 = vmatpush.msra.mxu0 %v776
    %806 = vmatpush.msra.mxu0 %v775
    %807 = vmatmul.f32.gmra.mxu0 %v780
    %v808 = vpop.f32.mrf.mxu0
    %v809 = vadd.f32 0.0, %v808
    %810 = vmatmul.f32.gmra.mxu0 %v783
    %v811 = vpop.f32.mrf.mxu0
    %v812 = vadd.f32 0.0, %v811
    %813 = vmatmul.f32.gmra.mxu0 %v786
    %v814 = vpop.f32.mrf.mxu0
    %v815 = vadd.f32 0.0, %v814
    %816 = vmatmul.f32.gmra.mxu0 %v789
    %v817 = vpop.f32.mrf.mxu0
    %v818 = vadd.f32 0.0, %v817
    %819 = vdwg.mxu0
    %v820 = vxor.u32 %v809, 2147483648
    %v821 = vxor.u32 %v812, 2147483648
    %v822 = vxor.u32 %v815, 2147483648
    %v823 = vxor.u32 %v818, 2147483648
    %v824 = vmul.f32 %v820, 1.442695
    %v825 = vpow.pop %v824
    %v826 = vmul.f32 %v821, 1.442695
    %v827 = vpow.pop %v826
    %v828 = vmul.f32 %v822, 1.442695
    %v829 = vpow.pop %v828
    %v830 = vmul.f32 %v823, 1.442695
    %v831 = vpow.pop %v830
    %v832 = vadd.f32 %v825, 1.0
    %v833 = vadd.f32 %v827, 1.0
    %v834 = vadd.f32 %v829, 1.0
    %v835 = vadd.f32 %v831, 1.0
    %v836 = vrcp.pop %v832
    %v837 = vmul.f32 %v832, %v836
    %v838 = vsub.f32 1.0, %v837
    %v839 = vmul.f32 %v836, %v838
    %v840 = vadd.f32 %v836, %v839
    %vm841 = vweird.f32 %v832
    %vm842 = vweird.f32 %v836
    %vm843 = vmor %vm841, %vm842
    %v844 = vsel %vm843, %v836, %v840
    %v845 = vand.u32 2147483647, %v832
    %vm846 = vcmp.eq.f32.partialorder %v845, 8.507059e+37
    %v847 = vand.u32 %v832, 2147483648
    %v848 = vor.u32 1.1754944e-38, %v847
    %v849 = vsel %vm846, %v848, %v844
    %v850 = vmul.f32 1.0, %v849
    %v851 = vrcp.pop %v833
    %v852 = vmul.f32 %v833, %v851
    %v853 = vsub.f32 1.0, %v852
    %v854 = vmul.f32 %v851, %v853
    %v855 = vadd.f32 %v851, %v854
    %vm856 = vweird.f32 %v833
    %vm857 = vweird.f32 %v851
    %vm858 = vmor %vm856, %vm857
    %v859 = vsel %vm858, %v851, %v855
    %v860 = vand.u32 2147483647, %v833
    %vm861 = vcmp.eq.f32.partialorder %v860, 8.507059e+37
    %v862 = vand.u32 %v833, 2147483648
    %v863 = vor.u32 1.1754944e-38, %v862
    %v864 = vsel %vm861, %v863, %v859
    %v865 = vmul.f32 1.0, %v864
    %v866 = vrcp.pop %v834
    %v867 = vmul.f32 %v834, %v866
    %v868 = vsub.f32 1.0, %v867
    %v869 = vmul.f32 %v866, %v868
    %v870 = vadd.f32 %v866, %v869
    %vm871 = vweird.f32 %v834
    %vm872 = vweird.f32 %v866
    %vm873 = vmor %vm871, %vm872
    %v874 = vsel %vm873, %v866, %v870
    %v875 = vand.u32 2147483647, %v834
    %vm876 = vcmp.eq.f32.partialorder %v875, 8.507059e+37
    %v877 = vand.u32 %v834, 2147483648
    %v878 = vor.u32 1.1754944e-38, %v877
    %v879 = vsel %vm876, %v878, %v874
    %v880 = vmul.f32 1.0, %v879
    %v881 = vrcp.pop %v835
    %v882 = vmul.f32 %v835, %v881
    %v883 = vsub.f32 1.0, %v882
    %v884 = vmul.f32 %v881, %v883
    %v885 = vadd.f32 %v881, %v884
    %vm886 = vweird.f32 %v835
    %vm887 = vweird.f32 %v881
    %vm888 = vmor %vm886, %vm887
    %v889 = vsel %vm888, %v881, %v885
    %v890 = vand.u32 2147483647, %v835
    %vm891 = vcmp.eq.f32.partialorder %v890, 8.507059e+37
    %v892 = vand.u32 %v835, 2147483648
    %v893 = vor.u32 1.1754944e-38, %v892
    %v894 = vsel %vm891, %v893, %v889
    %v895 = vmul.f32 1.0, %v894
    %v896 = vmul.f32 %v809, %v850
    %v897 = vmul.f32 %v812, %v865
    %v898 = vmul.f32 %v815, %v880
    %v899 = vmul.f32 %v818, %v895
    %v900 = vmul.f32 %v896, 1.6666666
    %v901 = vmul.f32 %v897, 1.6666666
    %v902 = vmul.f32 %v898, 1.6666666
    %v903 = vmul.f32 %v899, 1.6666666
    %v904 = vadd.f32 %v640, %v900
    %v905 = vadd.f32 %v641, %v901
    %v906 = vadd.f32 %v642, %v902
    %v907 = vadd.f32 %v643, %v903
    %v908 = vmul.f32 %v904, 0.70710677
    %v909 = vmul.f32 %v905, 0.70710677
    %v910 = vmul.f32 %v906, 0.70710677
    %v911 = vmul.f32 %v907, 0.70710677
    %v912 = vld [vmem:[#allocation5] sm:$0xff]
    %v913 = vld [vmem:[#allocation5 + $0x8] sm:$0xff]
    %914 = vmatpush.msra.mxu0 0.0
    %915 = vmatpush.msra.mxu0 0.0
    %916 = vmatpush.msra.mxu0 0.0
    %917 = vmatpush.msra.mxu0 0.0
    %918 = vmatpush.msra.mxu0 0.0
    %919 = vmatpush.msra.mxu0 0.0
    %920 = vmatpush.msra.mxu0 0.0
    %921 = vmatpush.msra.mxu0 0.0
    %922 = vmatpush.msra.mxu0 0.0
    %923 = vmatpush.msra.mxu0 0.0
    %924 = vmatpush.msra.mxu0 0.0
    %925 = vmatpush.msra.mxu0 0.0
    %926 = vmatpush.msra.mxu0 0.0
    %927 = vmatpush.msra.mxu0 0.0
    %928 = vmatpush.msra.mxu0 %v913
    %929 = vmatpush.msra.mxu0 %v912
    %930 = vmatmul.f32.gmra.mxu0 %v170
    %v931 = vpop.f32.mrf.mxu0
    %v932 = vadd.f32 0.0, %v931
    %933 = vmatmul.f32.gmra.mxu0 %v173
    %v934 = vpop.f32.mrf.mxu0
    %v935 = vadd.f32 0.0, %v934
    %936 = vmatmul.f32.gmra.mxu0 %v176
    %v937 = vpop.f32.mrf.mxu0
    %v938 = vadd.f32 0.0, %v937
    %939 = vmatmul.f32.gmra.mxu0 %v179
    %v940 = vpop.f32.mrf.mxu0
    %v941 = vadd.f32 0.0, %v940
    %942 = vdwg.mxu0
    %v943 = vmul.f32 %v908, %v932
    %v944 = vmul.f32 %v909, %v935
    %v945 = vmul.f32 %v910, %v938
    %v946 = vmul.f32 %v911, %v941
    %v947 = vld [vmem:[%s7] sm:$0xff]
    %v948 = vld [vmem:[%s7 + $0x8] sm:$0xff]
    %v949 = vld [vmem:[%s7 + $0x10] sm:$0xff]
    %v950 = vld [vmem:[%s7 + $0x18] sm:$0xff]
    %951 = vxpose.xlu0.b32.start [1/16] %v947, 128
    %952 = vxpose.xlu0.b32.cont [2/16] %v948, 128
    %953 = vxpose.xlu0.b32.cont [3/16] %v949, 128
    %954 = vxpose.xlu0.b32.cont [4/16] %v950, 128
    %955 = vxpose.xlu0.b32.cont [5/16] 0.0, 128
    %956 = vxpose.xlu0.b32.cont [6/16] 0.0, 128
    %957 = vxpose.xlu0.b32.cont [7/16] 0.0, 128
    %958 = vxpose.xlu0.b32.cont [8/16] 0.0, 128
    %959 = vxpose.xlu0.b32.cont [9/16] 0.0, 128
    %960 = vxpose.xlu0.b32.cont [10/16] 0.0, 128
    %961 = vxpose.xlu0.b32.cont [11/16] 0.0, 128
    %962 = vxpose.xlu0.b32.cont [12/16] 0.0, 128
    %963 = vxpose.xlu0.b32.cont [13/16] 0.0, 128
    %964 = vxpose.xlu0.b32.cont [14/16] 0.0, 128
    %965 = vxpose.xlu0.b32.cont [15/16] 0.0, 128
    %966 = vxpose.xlu0.b32.end [16/16] 0.0, 128
    %v967 = vpop.trf.xlu0
    %v968 = vpop.trf.xlu0
    %v969 = vpop.trf.xlu0
    %v970 = vpop.trf.xlu0
    %v971 = vpop.trf.xlu0
    %v972 = vpop.trf.xlu0
    %v973 = vpop.trf.xlu0
    %v974 = vpop.trf.xlu0
    %v975 = vpop.trf.xlu0
    %v976 = vpop.trf.xlu0
    %v977 = vpop.trf.xlu0
    %v978 = vpop.trf.xlu0
    %v979 = vpop.trf.xlu0
    %v980 = vpop.trf.xlu0
    %v981 = vpop.trf.xlu0
    %v982 = vpop.trf.xlu0
    %v984 = vsel %vm222, %v967, 0
    %v987 = vsel %vm222, %v943, 0
    %v990 = vsel %vm222, %v944, 0
    %v993 = vsel %vm222, %v945, 0
    %v996 = vsel %vm222, %v946, 0
    %998 = vmatpush.xpose.msra.mxu0 0.0
    %999 = vmatpush.xpose.msra.mxu0 0.0
    %1000 = vmatpush.xpose.msra.mxu0 0.0
    %1001 = vmatpush.xpose.msra.mxu0 0.0
    %1002 = vmatpush.xpose.msra.mxu0 0.0
    %1003 = vmatpush.xpose.msra.mxu0 0.0
    %1004 = vmatpush.xpose.msra.mxu0 0.0
    %1005 = vmatpush.xpose.msra.mxu0 0.0
    %1006 = vmatpush.xpose.msra.mxu0 0.0
    %1007 = vmatpush.xpose.msra.mxu0 0.0
    %1008 = vmatpush.xpose.msra.mxu0 0.0
    %1009 = vmatpush.xpose.msra.mxu0 0.0
    %1010 = vmatpush.xpose.msra.mxu0 %v996
    %1011 = vmatpush.xpose.msra.mxu0 %v993
    %1012 = vmatpush.xpose.msra.mxu0 %v990
    %1013 = vmatpush.xpose.msra.mxu0 %v987
    %1014 = vmatmul.f32.gmra.mxu0 %v984
    %v1015 = vpop.f32.mrf.mxu0
    %v1016 = vadd.f32 0.0, %v1015
    %1017 = vdwg.mxu0
    %vm1018 = vcmask 257024
    %1019 = vst.msk [vmem:[#allocation9] sm:$0xf] %vm1018, %v1016
    // Predicated region
    $region50: #{tpu_custom_call.1} parent=1 // pred_check
      _
    $region51: #{tpu_custom_call.1} parent=1 // pred_check_branch
      %1021 = sbr.rel (0) target = $region53
    $region52: #{tpu_custom_call.1} parent=1 // pred_region
      %1023 = vsyncadd [#allocation4], 0
      %s1025 = sshll.u32 [#allocation8], 4
      %s1026 = int_to_ptr.vmem [resolvable:$true] %s1025
      %s1027 = sshll.u32 %s8, 4
      %s1028 = int_to_ptr.hbm [resolvable:$true] %s1027
      %1030 = dma.vmem_to_hbm [thread:$0]  %s1026, 128, %s1028, [#allocation4]
    $region53: #{tpu_custom_call.1} parent=1 // pred_fallthru
      _
    // Predicated region
    $region54: #{tpu_custom_call.1} parent=1 // pred_check
      _
    $region55: #{tpu_custom_call.1} parent=1 // pred_check_branch
      %1032 = sbr.rel (0) target = $region57
    $region56: #{tpu_custom_call.1} parent=1 // pred_region
      %s1033 = sadd.s32 0, 0
      %p1034 = scmp.lt.s32.totalorder %s1033, 0
      %s1035 = scalar_select %p1034, %s1033, 0
      %1037 = vsyncadd [#allocation10], 0
      %s1038 = smul.addr %s1035, 4
      %s1039 = scalar_lea.hbm %s9, %s1038
      %s1041 = sshll.u32 [#allocation9], 4
      %s1042 = int_to_ptr.vmem [resolvable:$true] %s1041
      %s1043 = sshll.u32 %s1039, 4
      %s1044 = int_to_ptr.hbm [resolvable:$true] %s1043
      %1046 = dma.vmem_to_hbm [thread:$0]  %s1042, 64, %s1044, [#allocation10]
    $region57: #{tpu_custom_call.1} parent=1 // pred_fallthru
      _
    // Predicated region
    $region58: #{tpu_custom_call.1} parent=1 // pred_check
      _
    $region59: #{tpu_custom_call.1} parent=1 // pred_check_branch
      %1048 = sbr.rel (0) target = $region61
    $region60: #{tpu_custom_call.1} parent=1 // pred_region
      %1050 = dma.done [#allocation4], 128
    $region61: #{tpu_custom_call.1} parent=1 // pred_fallthru
      _
    // Predicated region
    $region62: #{tpu_custom_call.1} parent=1 // pred_check
      _
    $region63: #{tpu_custom_call.1} parent=1 // pred_check_branch
      %1052 = sbr.rel (0) target = $region65
    $region64: #{tpu_custom_call.1} parent=1 // pred_region
      %1054 = dma.done [#allocation10], 64
    $region65: #{tpu_custom_call.1} parent=1 // pred_fallthru
      _
    %1055 = vsyncpa [#allocation3], 1
    %1056 = vsyncpa [#allocation6], 1
    %1057 = vsyncpa [#allocation4], 1
    %1058 = vsyncpa [#allocation10], 1

</llo_original>
